<compile_context>
chip_gen: v7x
topology: tpu7x:2x2x1
jax: 0.10.0
libtpu: 0.0.40
codegen_flags: <defaults>
</compile_context>

<pallas_src>
import jax
import jax.numpy as jnp
from jax.experimental import pallas as pl
from jax.experimental.pallas import tpu as pltpu


_VMEM_LIMIT = 32 * 1024 * 1024   # safe on v5e/v6e/v7x; raises v5e's 16 MiB default


# ---------------------------------------------------------------------------
# helpers
# ---------------------------------------------------------------------------
def _round_up(x, m):
    return ((x + m - 1) // m) * m


def _auto_time_chunk(bt, hidden, gate_bytes, max_tc=16, budget=8 * 1024 * 1024):
    """Pick the time-chunk so the double-buffered gates slab stays within budget."""
    per_step = bt * 4 * hidden * gate_bytes * 2
    return int(max(1, min(max_tc, budget // max(per_step, 1))))


def _const_spec(shape):
    """Resident (constant-index) block covering the whole small weight array."""
    return pl.BlockSpec(shape, lambda b, n, _z=(0,) * len(shape): _z)


# ---------------------------------------------------------------------------
# Phase 1: batched input projection (non-recurrent)
#   gates_x[t] = relu(x[t] @ w_in + bias_bh) @ w_ih + b_g      (bias_bh folds the
#   constant-over-time `extra @ w_in_extra` contribution -> no concat, no broadcast)
# ---------------------------------------------------------------------------
def _proj_kernel(x_ref, bias_ref, win_ref, wih_ref, bg_ref, gx_ref):
    tc = x_ref.shape[0]
    win = win_ref[...]
    wih = wih_ref[...]
    bias = bias_ref[...]
    bg = bg_ref[...]

    def step(t, carry):
        x0 = jnp.maximum(
            jnp.dot(x_ref[t], win, preferred_element_type=jnp.float32) + bias, 0.0)
        gx_ref[t] = (jnp.dot(x0, wih, preferred_element_type=jnp.float32)
                     + bg).astype(gx_ref.dtype)
        return carry

    jax.lax.fori_loop(0, tc, step, 0, unroll=True)


def _input_projection(x, bias, w_in, w_ih, b_g, *, time_chunk, batch_tile, gates_dtype):
    t_pad, b_pad, nx = x.shape
    hidden = w_in.shape[1]
    tc, bt = time_chunk, batch_tile
    grid = (b_pad // bt, t_pad // tc)

    return pl.pallas_call(
        _proj_kernel,
        out_shape=jax.ShapeDtypeStruct((t_pad, b_pad, 4 * hidden), gates_dtype),
        grid_spec=pltpu.PrefetchScalarGridSpec(
            num_scalar_prefetch=0,
            grid=grid,
            in_specs=[pl.BlockSpec((tc, bt, nx), lambda b, n: (n, b, 0)),
                      pl.BlockSpec((bt, hidden), lambda b, n: (b, 0)),
                      _const_spec(w_in.shape),
                      _const_spec(w_ih.shape),
                      _const_spec(b_g.shape)],
            out_specs=pl.BlockSpec((tc, bt, 4 * hidden), lambda b, n: (n, b, 0))),
        compiler_params=pltpu.CompilerParams(
            dimension_semantics=("parallel", "parallel"),
            vmem_limit_bytes=_VMEM_LIMIT),
    )(x, bias, w_in, w_ih, b_g)


# ---------------------------------------------------------------------------
# Phase 2: serial LSTM recurrence, grid = (batch_tiles [parallel], time_chunks [arbitrary])
#   - h/c carried in VMEM scratch per batch tile (re-init at time chunk 0)
#   - linearOut fused:
#       seq2one=False: out[t] = h[t] @ w_out + b_out written per step (h never hits HBM)
#       seq2one=True : only the final h -> out = h_T @ w_out + b_out at the last chunk
# ---------------------------------------------------------------------------
def _make_recurrence_kernel(tc, t_real, t_pad, seq2one, unroll):
    needs_mask = seq2one and (t_pad != t_real)   # keep padded steps from corrupting h/c

    def kernel(gx_ref, whh_ref, wout_ref, bout_ref, out_ref, h_ref, c_ref):
        t_id = pl.program_id(1)

        @pl.when(t_id == 0)
        def _():
            h_ref[...] = jnp.zeros_like(h_ref)
            c_ref[...] = jnp.zeros_like(c_ref)

        hid = h_ref.shape[-1]
        whh = whh_ref[...]       # resident across the chunk
        wout = wout_ref[...]
        bout = bout_ref[...]
        t0 = t_id * tc

        def step(t, carry):
            h, c = carry
            gates = (gx_ref[t].astype(jnp.float32)
                     + jnp.dot(h, whh, preferred_element_type=jnp.float32))
            i = jax.nn.sigmoid(gates[:, 0 * hid:1 * hid])
            f = jax.nn.sigmoid(gates[:, 1 * hid:2 * hid])
            g = jnp.tanh(gates[:, 2 * hid:3 * hid])
            o = jax.nn.sigmoid(gates[:, 3 * hid:4 * hid])
            c_new = f * c + i * g
            h_new = o * jnp.tanh(c_new)
            if needs_mask:
                m = ((t0 + t) < t_real).astype(jnp.float32)
                h_new = h + m * (h_new - h)
                c_new = c + m * (c_new - c)
            if not seq2one:
                out_ref[t] = (jnp.dot(h_new, wout, preferred_element_type=jnp.float32)
                              + bout).astype(out_ref.dtype)
            return (h_new, c_new)

        h_fin, c_fin = jax.lax.fori_loop(0, tc, step, (h_ref[...], c_ref[...]),
                                         unroll=unroll)
        h_ref[...] = h_fin
        c_ref[...] = c_fin

        if seq2one:
            @pl.when(t_id == pl.num_programs(1) - 1)
            def _():
                out_ref[...] = (jnp.dot(h_fin, wout, preferred_element_type=jnp.float32)
                                + bout).astype(out_ref.dtype)

    return kernel


def _lstm_recurrence(gates, w_hh, w_out, b_out, *, t_real, time_chunk, batch_tile,
                     seq2one, unroll):
    t_pad, b_pad, h4 = gates.shape
    hidden = w_hh.shape[0]
    ny = w_out.shape[1]
    tc, bt = time_chunk, batch_tile
    grid = (b_pad // bt, t_pad // tc)

    if seq2one:
        out_shape = jax.ShapeDtypeStruct((b_pad, ny), jnp.float32)
        out_spec = pl.BlockSpec((bt, ny), lambda b, n: (b, 0))
    else:
        out_shape = jax.ShapeDtypeStruct((t_pad, b_pad, ny), jnp.float32)
        out_spec = pl.BlockSpec((tc, bt, ny), lambda b, n: (n, b, 0))

    kernel = _make_recurrence_kernel(tc, t_real, t_pad, seq2one, min(unroll, tc))

    return pl.pallas_call(
        kernel,
        out_shape=out_shape,
        grid_spec=pltpu.PrefetchScalarGridSpec(
            num_scalar_prefetch=0,
            grid=grid,
            in_specs=[pl.BlockSpec((tc, bt, h4), lambda b, n: (n, b, 0)),
                      _const_spec(w_hh.shape),
                      _const_spec(w_out.shape),
                      _const_spec(b_out.shape)],
            out_specs=out_spec,
            scratch_shapes=[pltpu.VMEM((bt, hidden), jnp.float32),   # h carry
                            pltpu.VMEM((bt, hidden), jnp.float32)],  # c carry
        ),
        compiler_params=pltpu.CompilerParams(
            dimension_semantics=("parallel", "arbitrary"),
            vmem_limit_bytes=_VMEM_LIMIT),
    )(gates, w_hh, w_out, b_out)


# ---------------------------------------------------------------------------
# CudnnLstmModel = relu(linearIn) -> LSTM -> linearOut   (2 Pallas phases, out fused)
# ---------------------------------------------------------------------------
def cudnn_lstm_model(x, params, *, extra=None, w_in_extra=None, seq2one=False,
                     time_chunk=16, batch_tile=256, gates_dtype=jnp.bfloat16,
                     unroll=4):
    """x: (T, B, nx) -> (T, B, ny)  (or (B, ny) when seq2one=True).

    `extra` (B, nfea) is an optional constant-over-time input with weight
    `w_in_extra` (nfea, H); its contribution is folded into a (B, H) bias so no
    concat([x, extra_rep]) or per-row broadcast is materialised (mathematically
    identical: concat@[Wx;Wf] = x@Wx + extra@Wf)."""
    T, B, _ = x.shape
    hidden = params["w_hh"].shape[0]

    bias = jnp.broadcast_to(params["b_in"].astype(jnp.float32), (B, hidden))
    if extra is not None:
        bias = bias + jnp.dot(extra, w_in_extra)     # tiny one-time (B,nfea)@(nfea,H)

    # batch tiling (parallel grid axis for v7x megacore; bounds per-core VMEM)
    if B <= batch_tile:
        bt, b_pad = B, B
    else:
        bt = max(8, (batch_tile // 8) * 8)
        b_pad = _round_up(B, bt)

    tc = _auto_time_chunk(bt, hidden, jnp.dtype(gates_dtype).itemsize, max_tc=time_chunk)
    tc = max(1, min(tc, T))
    t_pad = _round_up(T, tc)

    if (t_pad, b_pad) != (T, B):
        x = jnp.pad(x, ((0, t_pad - T), (0, b_pad - B), (0, 0)))
        bias = jnp.pad(bias, ((0, b_pad - B), (0, 0)))

    # Phase 1: batched input projection -> gates_x (T_pad, B_pad, 4H), bf16 intermediate
    gates = _input_projection(x, bias, params["w_in"], params["w_ih"], params["b_g"],
                              time_chunk=tc, batch_tile=bt, gates_dtype=gates_dtype)

    # Phase 2: serial recurrence with fused linearOut
    out = _lstm_recurrence(gates, params["w_hh"], params["w_out"], params["b_out"],
                           t_real=T, time_chunk=tc, batch_tile=bt,
                           seq2one=seq2one, unroll=unroll)
    if seq2one:
        return out[:B]
    return out[:T, :B]


# ---------------------------------------------------------------------------
# Pure-JAX reference (lax.scan) to validate the Pallas kernels
# ---------------------------------------------------------------------------
def cudnn_lstm_model_ref(x, p):
    H = p["w_hh"].shape[0]
    B = x.shape[1]

    def step(carry, xt_):
        h, c = carry
        x0 = jnp.maximum(xt_ @ p["w_in"] + p["b_in"], 0.0)
        gates = x0 @ p["w_ih"] + h @ p["w_hh"] + p["b_g"]
        i = jax.nn.sigmoid(gates[:, :H])
        f = jax.nn.sigmoid(gates[:, H:2 * H])
        g = jnp.tanh(gates[:, 2 * H:3 * H])
        o = jax.nn.sigmoid(gates[:, 3 * H:])
        c = f * c + i * g
        h = o * jnp.tanh(c)
        return (h, c), h @ p["w_out"] + p["b_out"]

    init = (jnp.zeros((B, H), jnp.float32), jnp.zeros((B, H), jnp.float32))
    _, outs = jax.lax.scan(step, init, x)
    return outs


def init_lstm_model_params(key, nx, hidden, ny, scale=0.1):
    ks = jax.random.split(key, 7)
    return {
        "w_in":  scale * jax.random.normal(ks[0], (nx, hidden), jnp.float32),
        "b_in":  scale * jax.random.normal(ks[1], (1, hidden), jnp.float32),
        "w_ih":  scale * jax.random.normal(ks[2], (hidden, 4 * hidden), jnp.float32),
        "w_hh":  scale * jax.random.normal(ks[3], (hidden, 4 * hidden), jnp.float32),
        "b_g":   scale * jax.random.normal(ks[4], (1, 4 * hidden), jnp.float32),
        "w_out": scale * jax.random.normal(ks[5], (hidden, ny), jnp.float32),
        "b_out": scale * jax.random.normal(ks[6], (1, ny), jnp.float32),
    }


# ---------------------------------------------------------------------------
# forward(qnc, qxc) -> (out_lstm, param), mirroring the PyTorch wrapper
# ---------------------------------------------------------------------------
def cudnn_lstm_model_storage_seq2one_pretrain_forward(qnc, qxc, params_storage,
                                                      params_main,
                                                      do_drop_mc=False,
                                                      dropout_false=False,
                                                      **kw):
    # TODO(synk): the pretrained `lstm_storage` is torch.load()'d in the original module;
    # its architecture (hydroDL seq2one storage-LSTM) is reconstructed here with
    # deterministic synthetic weights instead of a checkpoint.
    # storage model in seq2one mode: only the final hidden state is produced/projected
    param = cudnn_lstm_model(qnc, params_storage, seq2one=True, **kw)   # (B, nfea)

    nx = qxc.shape[-1]
    # Split the main model's linearIn weight: no [qxc, param] concat is needed.
    w_in_x = params_main["w_in"][:nx]
    w_in_f = params_main["w_in"][nx:]
    params_main_x = dict(params_main, w_in=w_in_x)
    out_lstm = cudnn_lstm_model(qxc, params_main_x, extra=param, w_in_extra=w_in_f, **kw)
    return out_lstm, param


if __name__ == "__main__":
    key = jax.random.PRNGKey(0)
    Tn, Tx, B = 10, 9, 2
    nqnc, nx, nfea = 5, 4, 3
    hidden_storage, hidden, ny = 32, 32, 1

    k_qnc, k_qxc, k_p1, k_p2 = jax.random.split(key, 4)
    qnc = jax.random.normal(k_qnc, (Tn, B, nqnc), jnp.float32)   # storage-period forcings
    qxc = jax.random.normal(k_qxc, (Tx, B, nx), jnp.float32)     # target-period forcings

    params_storage = init_lstm_model_params(k_p1, nqnc, hidden_storage, nfea)
    params_main = init_lstm_model_params(k_p2, nx + nfea, hidden, ny)

    # time_chunk=4 also exercises time padding + the seq2one padded-step mask path
    out_lstm, param = cudnn_lstm_model_storage_seq2one_pretrain_forward(
        qnc, qxc, params_storage, params_main, time_chunk=4)
    jax.block_until_ready((out_lstm, param))

    # shape checks
    assert out_lstm.shape == (Tx, B, ny), out_lstm.shape
    assert param.shape == (B, nfea), param.shape

    # numerical check against the pure-JAX (concat-based, fp32) reference.
    # tolerance loosened slightly because gates_x is stored in bf16 (gate math stays fp32).
    gen_ref = cudnn_lstm_model_ref(qnc, params_storage)
    param_ref = gen_ref[-1]
    x1_ref = jnp.concatenate(
        [qxc, jnp.broadcast_to(param_ref[None], (Tx, B, nfea))], axis=2)
    out_ref = cudnn_lstm_model_ref(x1_ref, params_main)
    assert jnp.allclose(param, param_ref, atol=1e-2, rtol=1e-2)
    assert jnp.allclose(out_lstm, out_ref, atol=1e-2, rtol=1e-2)

    print("KERNEL_OK")
</pallas_src>

<mosaic_0001>
module attributes {stable_mosaic.version = 11 : i64} {
  func.func @_proj_kernel(%arg0: i32, %arg1: i32, %arg2: memref<4x2x5xf32, #tpu.memory_space<vmem>>, %arg3: memref<2x32xf32, #tpu.memory_space<vmem>>, %arg4: memref<5x32xf32, #tpu.memory_space<vmem>>, %arg5: memref<32x128xf32, #tpu.memory_space<vmem>>, %arg6: memref<1x128xf32, #tpu.memory_space<vmem>>, %arg7: memref<4x2x128xbf16, #tpu.memory_space<vmem>>) attributes {dimension_semantics = [#tpu.dimension_semantics<parallel>, #tpu.dimension_semantics<parallel>], iteration_bounds = array<i64: 1, 3>, scalar_prefetch = 0 : i64, scratch_operands = 0 : i64, tpu.core_type = #tpu.core_type<tc>, window_params = [{transform_indices = @transform_0, window_bounds = array<i64: 4, 2, 5>}, {transform_indices = @transform_1, window_bounds = array<i64: 2, 32>}, {pipeline_mode = #tpu.pipeline_mode<synchronous>, transform_indices = @transform_2, window_bounds = array<i64: 5, 32>}, {pipeline_mode = #tpu.pipeline_mode<synchronous>, transform_indices = @transform_3, window_bounds = array<i64: 32, 128>}, {pipeline_mode = #tpu.pipeline_mode<synchronous>, transform_indices = @transform_4, window_bounds = array<i64: 1, 128>}, {transform_indices = @transform_5, window_bounds = array<i64: 4, 2, 128>}]} {
    %c0 = arith.constant 0 : index
    %c0_0 = arith.constant 0 : index
    %0 = vector.load %arg4[%c0, %c0_0] : memref<5x32xf32, #tpu.memory_space<vmem>>, vector<5x32xf32>
    %c0_1 = arith.constant 0 : index
    %c0_2 = arith.constant 0 : index
    %1 = vector.load %arg5[%c0_1, %c0_2] : memref<32x128xf32, #tpu.memory_space<vmem>>, vector<32x128xf32>
    %c0_3 = arith.constant 0 : index
    %c0_4 = arith.constant 0 : index
    %2 = vector.load %arg3[%c0_3, %c0_4] : memref<2x32xf32, #tpu.memory_space<vmem>>, vector<2x32xf32>
    %c0_5 = arith.constant 0 : index
    %c0_6 = arith.constant 0 : index
    %3 = vector.load %arg6[%c0_5, %c0_6] : memref<1x128xf32, #tpu.memory_space<vmem>>, vector<1x128xf32>
    %c0_i32 = arith.constant 0 : i32
    %4 = arith.index_cast %c0_i32 : i32 to index
    %c0_7 = arith.constant 0 : index
    %c0_8 = arith.constant 0 : index
    %5 = vector.load %arg2[%4, %c0_7, %c0_8] : memref<4x2x5xf32, #tpu.memory_space<vmem>>, vector<1x2x5xf32>
    %6 = vector.shape_cast %5 : vector<1x2x5xf32> to vector<2x5xf32>
    %cst = arith.constant dense<0.000000e+00> : vector<2x32xf32>
    %7 = tpu.matmul %6, %0, %cst {dimension_numbers = #tpu.dot_dimension_numbers<[1], [0], [0], [1], [0, 0, 1, 1], [], []>} : vector<2x5xf32>, vector<5x32xf32>, vector<2x32xf32> -> vector<2x32xf32>
    %8 = arith.addf %7, %2 : vector<2x32xf32>
    %cst_9 = arith.constant 0.000000e+00 : f32
    %9 = vector.broadcast %cst_9 : f32 to vector<2x32xf32>
    %10 = arith.maximumf %8, %9 : vector<2x32xf32>
    %cst_10 = arith.constant dense<0.000000e+00> : vector<2x128xf32>
    %11 = tpu.matmul %10, %1, %cst_10 {dimension_numbers = #tpu.dot_dimension_numbers<[1], [0], [0], [1], [0, 0, 1, 1], [], []>} : vector<2x32xf32>, vector<32x128xf32>, vector<2x128xf32> -> vector<2x128xf32>
    %12 = vector.broadcast %3 : vector<1x128xf32> to vector<2x128xf32>
    %13 = arith.addf %11, %12 : vector<2x128xf32>
    %14 = arith.truncf %13 : vector<2x128xf32> to vector<2x128xbf16>
    %15 = arith.index_cast %c0_i32 : i32 to index
    %c0_11 = arith.constant 0 : index
    %c0_12 = arith.constant 0 : index
    %16 = vector.load %arg7[%15, %c0_11, %c0_12] : memref<4x2x128xbf16, #tpu.memory_space<vmem>>, vector<1x2x128xbf16>
    %17 = vector.shape_cast %16 : vector<1x2x128xbf16> to vector<2x128xbf16>
    %18 = vector.shape_cast %14 : vector<2x128xbf16> to vector<1x2x128xbf16>
    tpu.vector_store %arg7[%15, %c0_11, %c0_12], %18 {strides = array<i32>} : memref<4x2x128xbf16, #tpu.memory_space<vmem>>, vector<1x2x128xbf16>,
    %c1_i32 = arith.constant 1 : i32
    %19 = arith.index_cast %c1_i32 : i32 to index
    %c0_13 = arith.constant 0 : index
    %c0_14 = arith.constant 0 : index
    %20 = vector.load %arg2[%19, %c0_13, %c0_14] : memref<4x2x5xf32, #tpu.memory_space<vmem>>, vector<1x2x5xf32>
    %21 = vector.shape_cast %20 : vector<1x2x5xf32> to vector<2x5xf32>
    %cst_15 = arith.constant dense<0.000000e+00> : vector<2x32xf32>
    %22 = tpu.matmul %21, %0, %cst_15 {dimension_numbers = #tpu.dot_dimension_numbers<[1], [0], [0], [1], [0, 0, 1, 1], [], []>} : vector<2x5xf32>, vector<5x32xf32>, vector<2x32xf32> -> vector<2x32xf32>
    %23 = arith.addf %22, %2 : vector<2x32xf32>
    %cst_16 = arith.constant 0.000000e+00 : f32
    %24 = vector.broadcast %cst_16 : f32 to vector<2x32xf32>
    %25 = arith.maximumf %23, %24 : vector<2x32xf32>
    %cst_17 = arith.constant dense<0.000000e+00> : vector<2x128xf32>
    %26 = tpu.matmul %25, %1, %cst_17 {dimension_numbers = #tpu.dot_dimension_numbers<[1], [0], [0], [1], [0, 0, 1, 1], [], []>} : vector<2x32xf32>, vector<32x128xf32>, vector<2x128xf32> -> vector<2x128xf32>
    %27 = vector.broadcast %3 : vector<1x128xf32> to vector<2x128xf32>
    %28 = arith.addf %26, %27 : vector<2x128xf32>
    %29 = arith.truncf %28 : vector<2x128xf32> to vector<2x128xbf16>
    %30 = arith.index_cast %c1_i32 : i32 to index
    %c0_18 = arith.constant 0 : index
    %c0_19 = arith.constant 0 : index
    %31 = vector.load %arg7[%30, %c0_18, %c0_19] : memref<4x2x128xbf16, #tpu.memory_space<vmem>>, vector<1x2x128xbf16>
    %32 = vector.shape_cast %31 : vector<1x2x128xbf16> to vector<2x128xbf16>
    %33 = vector.shape_cast %29 : vector<2x128xbf16> to vector<1x2x128xbf16>
    tpu.vector_store %arg7[%30, %c0_18, %c0_19], %33 {strides = array<i32>} : memref<4x2x128xbf16, #tpu.memory_space<vmem>>, vector<1x2x128xbf16>,
    %c2_i32 = arith.constant 2 : i32
    %34 = arith.index_cast %c2_i32 : i32 to index
    %c0_20 = arith.constant 0 : index
    %c0_21 = arith.constant 0 : index
    %35 = vector.load %arg2[%34, %c0_20, %c0_21] : memref<4x2x5xf32, #tpu.memory_space<vmem>>, vector<1x2x5xf32>
    %36 = vector.shape_cast %35 : vector<1x2x5xf32> to vector<2x5xf32>
    %cst_22 = arith.constant dense<0.000000e+00> : vector<2x32xf32>
    %37 = tpu.matmul %36, %0, %cst_22 {dimension_numbers = #tpu.dot_dimension_numbers<[1], [0], [0], [1], [0, 0, 1, 1], [], []>} : vector<2x5xf32>, vector<5x32xf32>, vector<2x32xf32> -> vector<2x32xf32>
    %38 = arith.addf %37, %2 : vector<2x32xf32>
    %cst_23 = arith.constant 0.000000e+00 : f32
    %39 = vector.broadcast %cst_23 : f32 to vector<2x32xf32>
    %40 = arith.maximumf %38, %39 : vector<2x32xf32>
    %cst_24 = arith.constant dense<0.000000e+00> : vector<2x128xf32>
    %41 = tpu.matmul %40, %1, %cst_24 {dimension_numbers = #tpu.dot_dimension_numbers<[1], [0], [0], [1], [0, 0, 1, 1], [], []>} : vector<2x32xf32>, vector<32x128xf32>, vector<2x128xf32> -> vector<2x128xf32>
    %42 = vector.broadcast %3 : vector<1x128xf32> to vector<2x128xf32>
    %43 = arith.addf %41, %42 : vector<2x128xf32>
    %44 = arith.truncf %43 : vector<2x128xf32> to vector<2x128xbf16>
    %45 = arith.index_cast %c2_i32 : i32 to index
    %c0_25 = arith.constant 0 : index
    %c0_26 = arith.constant 0 : index
    %46 = vector.load %arg7[%45, %c0_25, %c0_26] : memref<4x2x128xbf16, #tpu.memory_space<vmem>>, vector<1x2x128xbf16>
    %47 = vector.shape_cast %46 : vector<1x2x128xbf16> to vector<2x128xbf16>
    %48 = vector.shape_cast %44 : vector<2x128xbf16> to vector<1x2x128xbf16>
    tpu.vector_store %arg7[%45, %c0_25, %c0_26], %48 {strides = array<i32>} : memref<4x2x128xbf16, #tpu.memory_space<vmem>>, vector<1x2x128xbf16>,
    %c3_i32 = arith.constant 3 : i32
    %49 = arith.index_cast %c3_i32 : i32 to index
    %c0_27 = arith.constant 0 : index
    %c0_28 = arith.constant 0 : index
    %50 = vector.load %arg2[%49, %c0_27, %c0_28] : memref<4x2x5xf32, #tpu.memory_space<vmem>>, vector<1x2x5xf32>
    %51 = vector.shape_cast %50 : vector<1x2x5xf32> to vector<2x5xf32>
    %cst_29 = arith.constant dense<0.000000e+00> : vector<2x32xf32>
    %52 = tpu.matmul %51, %0, %cst_29 {dimension_numbers = #tpu.dot_dimension_numbers<[1], [0], [0], [1], [0, 0, 1, 1], [], []>} : vector<2x5xf32>, vector<5x32xf32>, vector<2x32xf32> -> vector<2x32xf32>
    %53 = arith.addf %52, %2 : vector<2x32xf32>
    %cst_30 = arith.constant 0.000000e+00 : f32
    %54 = vector.broadcast %cst_30 : f32 to vector<2x32xf32>
    %55 = arith.maximumf %53, %54 : vector<2x32xf32>
    %cst_31 = arith.constant dense<0.000000e+00> : vector<2x128xf32>
    %56 = tpu.matmul %55, %1, %cst_31 {dimension_numbers = #tpu.dot_dimension_numbers<[1], [0], [0], [1], [0, 0, 1, 1], [], []>} : vector<2x32xf32>, vector<32x128xf32>, vector<2x128xf32> -> vector<2x128xf32>
    %57 = vector.broadcast %3 : vector<1x128xf32> to vector<2x128xf32>
    %58 = arith.addf %56, %57 : vector<2x128xf32>
    %59 = arith.truncf %58 : vector<2x128xf32> to vector<2x128xbf16>
    %60 = arith.index_cast %c3_i32 : i32 to index
    %c0_32 = arith.constant 0 : index
    %c0_33 = arith.constant 0 : index
    %61 = vector.load %arg7[%60, %c0_32, %c0_33] : memref<4x2x128xbf16, #tpu.memory_space<vmem>>, vector<1x2x128xbf16>
    %62 = vector.shape_cast %61 : vector<1x2x128xbf16> to vector<2x128xbf16>
    %63 = vector.shape_cast %59 : vector<2x128xbf16> to vector<1x2x128xbf16>
    tpu.vector_store %arg7[%60, %c0_32, %c0_33], %63 {strides = array<i32>} : memref<4x2x128xbf16, #tpu.memory_space<vmem>>, vector<1x2x128xbf16>,
    %c4_i32 = arith.constant 4 : i32
    return
  }
  func.func @transform_0(%arg0: i32, %arg1: i32) -> (i32, i32, i32) {
    %c0_i32 = arith.constant 0 : i32
    %c0_i32_0 = arith.constant 0 : i32
    return %arg1, %arg0, %c0_i32 : i32, i32, i32
  }
  func.func @transform_1(%arg0: i32, %arg1: i32) -> (i32, i32) {
    %c0_i32 = arith.constant 0 : i32
    %c0_i32_0 = arith.constant 0 : i32
    return %arg0, %c0_i32 : i32, i32
  }
  func.func @transform_2(%arg0: i32, %arg1: i32) -> (i32, i32) {
    %c0_i32 = arith.constant 0 : i32
    %c0_i32_0 = arith.constant 0 : i32
    %c0_i32_1 = arith.constant 0 : i32
    return %c0_i32, %c0_i32_0 : i32, i32
  }
  func.func @transform_3(%arg0: i32, %arg1: i32) -> (i32, i32) {
    %c0_i32 = arith.constant 0 : i32
    %c0_i32_0 = arith.constant 0 : i32
    %c0_i32_1 = arith.constant 0 : i32
    return %c0_i32, %c0_i32_0 : i32, i32
  }
  func.func @transform_4(%arg0: i32, %arg1: i32) -> (i32, i32) {
    %c0_i32 = arith.constant 0 : i32
    %c0_i32_0 = arith.constant 0 : i32
    %c0_i32_1 = arith.constant 0 : i32
    return %c0_i32, %c0_i32_0 : i32, i32
  }
  func.func @transform_5(%arg0: i32, %arg1: i32) -> (i32, i32, i32) {
    %c0_i32 = arith.constant 0 : i32
    %c0_i32_0 = arith.constant 0 : i32
    return %arg1, %arg0, %c0_i32 : i32, i32, i32
  }
}

</mosaic_0001>

<llo_original>
// kernel: tpu_custom_call.1
$region0: #{tpu_custom_call.1}
  #allocation0 [shape = 'u32[]', space=smem, size = 0x4, offset = 0x4, fixed_abs, tag = 'smem constant byte address 0x4 - core index']
  #allocation1 [shape = 'u32[144,128]{1,0:T(1,128)}', space=vmem, size = 0x12000, scoped, tag = 'internal scratch']
  %s0 = inlined_call_operand.vmem [shape: f32[12,2,5], index: 0, kind: input, shape index: {}]
  %s1 = inlined_call_operand.vmem [shape: f32[2,32], index: 1, kind: input, shape index: {}]
  %s2 = inlined_call_operand.vmem [shape: f32[5,32], index: 2, kind: input, shape index: {}]
  %s3 = inlined_call_operand.vmem [shape: f32[32,128], index: 3, kind: input, shape index: {}]
  %s4 = inlined_call_operand.vmem [shape: f32[1,128], index: 4, kind: input, shape index: {}]
  %s5 = inlined_call_operand.hbm [shape: bf16[12,2,128], index: 5, kind: output, shape index: {}]
  %s6 = sld [smem:[#allocation0]]
  $region53: #{tpu_custom_call.1} parent=0
    _
  %s8 = ssub.s32 1, %s6
  %s9 = scalar_select 0, %s8, %s6
  $region1: #{tpu_custom_call.1} parent=0
    #allocation2 [shape = 'u8[4096]{0}', space=vmem, size = 0x1000, scoped, tag = 'output window, operand 0']
    #allocation3 [shape = 's32[2]{0}', space=sflag, size = 0x8, scoped, tag = 'scoped memory for tpu_custom_call.1']
    %10 = vsyncpa [#allocation3], 0
    %s11 = scalar_lea.sflag [#allocation3], 1
    %12 = vsyncpa %s11, 0
    loop: start=0, step=1, limit=5
    $region2: #{tpu_custom_call.1} parent=1 // loop_pre_header
      _
    $region3: #{tpu_custom_call.1} parent=1 // loop_header
      %s14 = sphi 0, %s18
      %p15 = scmp.ge.s32.totalorder %s14, 5
      %s21 = sphi 0, %s33
      %s22 = sphi 0, %s29
      %s23 = sphi 0, %s21
      %s24 = sphi 0, %s22
      %s25 = sphi 0, %s23
      %s26 = sphi 0, %s24
      %s38 = sphi 0, %s40
      %s41 = sphi 0, %s38
      %s42 = sphi 0, %s41
      %s58 = sphi 0, %s42
      %s64 = sphi 0, %s66
      %s67 = sphi 0, %s64
      %s68 = sphi 0, %s67
      %s84 = sphi 0, %s68
      %s88 = sphi 0, %s88
      %s90 = sphi 0, %s88
      %s91 = sphi 0, %s90
      %s105 = sphi 0, %s91
      %s109 = sphi 0, %s109
      %s111 = sphi 0, %s109
      %s112 = sphi 0, %s111
      %s126 = sphi 0, %s112
      %s130 = sphi 0, %s130
      %s132 = sphi 0, %s130
      %s133 = sphi 0, %s132
      %s147 = sphi 0, %s133
      %s155 = sphi 0, %s157
      %s158 = sphi 0, %s155
      %s159 = sphi 0, %s158
      %s175 = sphi 0, %s159
    $region4: #{tpu_custom_call.1} parent=1 // loop_header_branch
      %17 = sbr.rel (%p15) target = $region8
    $region5: #{tpu_custom_call.1} parent=1 // loop_body
      %s19 = ssub.s32 %s14, 1
      %s20 = ssub.s32 %s14, 2
      %s27 = sadd.s32 1, %s22
      %p28 = scmp.ge.s32.totalorder %s27, 3
      %s29 = scalar_select %p28, 0, %s27
      %s30 = sadd.s32 1, %s21
      %s31 = scalar_select %p28, %s30, %s21
      %p32 = scmp.ge.s32.totalorder %s31, 1
      %s33 = scalar_select %p32, 0, %s31
      %s34 = ssub.s32 %s22, %s29
      %s35 = ssub.s32 %s21, %s33
      %s36 = sor.u32 %s34, %s35
      %p37 = scmp.eq.s32.totalorder %s36, 0
      %s39 = sadd.s32 %s38, 1
      %s40 = scalar_select %p37, %s38, %s39
      %p43 = pneg %p37
      %p44 = scmp.eq.s32.totalorder %s14, 2
      %p45 = por %p43, %p44
      %p46 = scmp.ne.s32.totalorder %s38, %s41
      %p47 = scmp.eq.s32.totalorder %s14, 0
      %p48 = por %p46, %p47
      %p49 = scmp.ne.s32.totalorder %s38, %s41
      %p50 = scmp.eq.s32.totalorder %s19, 2
      %p51 = por %p49, %p50
      %p52 = scmp.ne.s32.totalorder %s41, %s42
      %p53 = scmp.eq.s32.totalorder %s19, 0
      %p54 = por %p52, %p53
      %p55 = scmp.ne.s32.totalorder %s41, %s42
      %p56 = scmp.eq.s32.totalorder %s20, 2
      %p57 = por %p55, %p56
      %p59 = scmp.ne.s32.totalorder %s42, %s58
      %p60 = scmp.eq.s32.totalorder %s20, 0
      %p61 = por %p59, %p60
      %s62 = ssub.s32 %s21, %s33
      %p63 = scmp.eq.s32.totalorder %s62, 0
      %s65 = sadd.s32 %s64, 1
      %s66 = scalar_select %p63, %s64, %s65
      %p69 = pneg %p63
      %p70 = scmp.eq.s32.totalorder %s14, 2
      %p71 = por %p69, %p70
      %p72 = scmp.ne.s32.totalorder %s64, %s67
      %p73 = scmp.eq.s32.totalorder %s14, 0
      %p74 = por %p72, %p73
      %p75 = scmp.ne.s32.totalorder %s64, %s67
      %p76 = scmp.eq.s32.totalorder %s19, 2
      %p77 = por %p75, %p76
      %p78 = scmp.ne.s32.totalorder %s67, %s68
      %p79 = scmp.eq.s32.totalorder %s19, 0
      %p80 = por %p78, %p79
      %p81 = scmp.ne.s32.totalorder %s67, %s68
      %p82 = scmp.eq.s32.totalorder %s20, 2
      %p83 = por %p81, %p82
      %p85 = scmp.ne.s32.totalorder %s68, %s84
      %p86 = scmp.eq.s32.totalorder %s20, 0
      %p87 = por %p85, %p86
      %s89 = sadd.s32 %s88, 1
      %p92 = scmp.eq.s32.totalorder %s14, 2
      %p93 = scmp.ne.s32.totalorder %s88, %s90
      %p94 = scmp.eq.s32.totalorder %s14, 0
      %p95 = por %p93, %p94
      %p96 = scmp.ne.s32.totalorder %s88, %s90
      %p97 = scmp.eq.s32.totalorder %s19, 2
      %p98 = por %p96, %p97
      %p99 = scmp.ne.s32.totalorder %s90, %s91
      %p100 = scmp.eq.s32.totalorder %s19, 0
      %p101 = por %p99, %p100
      %p102 = scmp.ne.s32.totalorder %s90, %s91
      %p103 = scmp.eq.s32.totalorder %s20, 2
      %p104 = por %p102, %p103
      %p106 = scmp.ne.s32.totalorder %s91, %s105
      %p107 = scmp.eq.s32.totalorder %s20, 0
      %p108 = por %p106, %p107
      %s110 = sadd.s32 %s109, 1
      %p113 = scmp.eq.s32.totalorder %s14, 2
      %p114 = scmp.ne.s32.totalorder %s109, %s111
      %p115 = scmp.eq.s32.totalorder %s14, 0
      %p116 = por %p114, %p115
      %p117 = scmp.ne.s32.totalorder %s109, %s111
      %p118 = scmp.eq.s32.totalorder %s19, 2
      %p119 = por %p117, %p118
      %p120 = scmp.ne.s32.totalorder %s111, %s112
      %p121 = scmp.eq.s32.totalorder %s19, 0
      %p122 = por %p120, %p121
      %p123 = scmp.ne.s32.totalorder %s111, %s112
      %p124 = scmp.eq.s32.totalorder %s20, 2
      %p125 = por %p123, %p124
      %p127 = scmp.ne.s32.totalorder %s112, %s126
      %p128 = scmp.eq.s32.totalorder %s20, 0
      %p129 = por %p127, %p128
      %s131 = sadd.s32 %s130, 1
      %p134 = scmp.eq.s32.totalorder %s14, 2
      %p135 = scmp.ne.s32.totalorder %s130, %s132
      %p136 = scmp.eq.s32.totalorder %s14, 0
      %p137 = por %p135, %p136
      %p138 = scmp.ne.s32.totalorder %s130, %s132
      %p139 = scmp.eq.s32.totalorder %s19, 2
      %p140 = por %p138, %p139
      %p141 = scmp.ne.s32.totalorder %s132, %s133
      %p142 = scmp.eq.s32.totalorder %s19, 0
      %p143 = por %p141, %p142
      %p144 = scmp.ne.s32.totalorder %s132, %s133
      %p145 = scmp.eq.s32.totalorder %s20, 2
      %p146 = por %p144, %p145
      %p148 = scmp.ne.s32.totalorder %s133, %s147
      %p149 = scmp.eq.s32.totalorder %s20, 0
      %p150 = por %p148, %p149
      %s151 = ssub.s32 %s22, %s29
      %s152 = ssub.s32 %s21, %s33
      %s153 = sor.u32 %s151, %s152
      %p154 = scmp.eq.s32.totalorder %s153, 0
      %s156 = sadd.s32 %s155, 1
      %s157 = scalar_select %p154, %s155, %s156
      %p160 = pneg %p154
      %p161 = scmp.eq.s32.totalorder %s14, 2
      %p162 = por %p160, %p161
      %p163 = scmp.ne.s32.totalorder %s155, %s158
      %p164 = scmp.eq.s32.totalorder %s14, 0
      %p165 = por %p163, %p164
      %p166 = scmp.ne.s32.totalorder %s155, %s158
      %p167 = scmp.eq.s32.totalorder %s19, 2
      %p168 = por %p166, %p167
      %p169 = scmp.ne.s32.totalorder %s158, %s159
      %p170 = scmp.eq.s32.totalorder %s19, 0
      %p171 = por %p169, %p170
      %p172 = scmp.ne.s32.totalorder %s158, %s159
      %p173 = scmp.eq.s32.totalorder %s20, 2
      %p174 = por %p172, %p173
      %p176 = scmp.ne.s32.totalorder %s159, %s175
      %p177 = scmp.eq.s32.totalorder %s20, 0
      %p178 = por %p176, %p177
      %p179 = scmp.le.s32.totalorder 1, %s14
      %p180 = scmp.lt.s32.totalorder %s14, 4
      %p181 = pnand %p179, %p180
      %p182 = pneg %p181
      // Predicated region
      $region9: #{tpu_custom_call.1} parent=5 // pred_check
        _
      $region10: #{tpu_custom_call.1} parent=5 // pred_check_branch
        %184 = sbr.rel (%p181) target = $region12
      $region11: #{tpu_custom_call.1} parent=5 // pred_region
        %s185 = ssub.s32 %s14, 1
        // Predicated region
        $region13: #{tpu_custom_call.1} parent=11 // pred_check
          %p186 = pneg %p80
        $region14: #{tpu_custom_call.1} parent=11 // pred_check_branch
          %188 = sbr.rel (%p186) target = $region16
        $region15: #{tpu_custom_call.1} parent=11 // pred_region
          %p189 = scmp.lt.s32.totalorder %s23, 0
          %s190 = scalar_select %p189, %s23, 0
          %s191 = smul.addr %s190, 2
          %s192 = scalar_lea.vmem %s1, %s191
        $region16: #{tpu_custom_call.1} parent=11 // pred_fallthru
          _
        // Predicated region
        $region17: #{tpu_custom_call.1} parent=11 // pred_check
          %p193 = pneg %p101
        $region18: #{tpu_custom_call.1} parent=11 // pred_check_branch
          %195 = sbr.rel (%p193) target = $region20
        $region19: #{tpu_custom_call.1} parent=11 // pred_region
          _
        $region20: #{tpu_custom_call.1} parent=11 // pred_fallthru
          _
        // Predicated region
        $region21: #{tpu_custom_call.1} parent=11 // pred_check
          %p196 = pneg %p122
        $region22: #{tpu_custom_call.1} parent=11 // pred_check_branch
          %198 = sbr.rel (%p196) target = $region24
        $region23: #{tpu_custom_call.1} parent=11 // pred_region
          _
        $region24: #{tpu_custom_call.1} parent=11 // pred_fallthru
          _
        // Predicated region
        $region25: #{tpu_custom_call.1} parent=11 // pred_check
          %p199 = pneg %p143
        $region26: #{tpu_custom_call.1} parent=11 // pred_check_branch
          %201 = sbr.rel (%p199) target = $region28
        $region27: #{tpu_custom_call.1} parent=11 // pred_region
          _
        $region28: #{tpu_custom_call.1} parent=11 // pred_fallthru
          _
      $region12: #{tpu_custom_call.1} parent=5 // pred_fallthru
        _
      %p202 = scmp.lt.s32.totalorder %s14, 3
      // Predicated region
      $region29: #{tpu_custom_call.1} parent=5 // pred_check
        %p203 = pneg %p202
      $region30: #{tpu_custom_call.1} parent=5 // pred_check_branch
        %205 = sbr.rel (%p203) target = $region32
      $region31: #{tpu_custom_call.1} parent=5 // pred_region
        // Predicated region
        $region33: #{tpu_custom_call.1} parent=31 // pred_check
          %p206 = pneg %p48
        $region34: #{tpu_custom_call.1} parent=31 // pred_check_branch
          %208 = sbr.rel (%p206) target = $region36
        $region35: #{tpu_custom_call.1} parent=31 // pred_region
          %s209 = smul.u32 4, %s22
          %p210 = scmp.lt.s32.totalorder %s209, 11
          %s211 = scalar_select %p210, %s209, 11
          %p212 = scmp.lt.s32.totalorder %s21, 0
          %s213 = scalar_select %p212, %s21, 0
          %s214 = sadd.s32 %s213, %s211
          %s215 = smul.addr %s214, 2
          %s216 = scalar_lea.vmem %s0, %s215
          %s217 = smul.u32 4, %s22
        $region36: #{tpu_custom_call.1} parent=31 // pred_fallthru
          _
      $region32: #{tpu_custom_call.1} parent=5 // pred_fallthru
        _
      %p218 = scmp.le.s32.totalorder 1, %s14
      %p219 = scmp.lt.s32.totalorder %s14, 4
      %p220 = pnand %p218, %p219
      %p221 = pneg %p220
      // Predicated region
      $region37: #{tpu_custom_call.1} parent=5 // pred_check
        _
      $region38: #{tpu_custom_call.1} parent=5 // pred_check_branch
        %223 = sbr.rel (%p220) target = $region40
      $region39: #{tpu_custom_call.1} parent=5 // pred_region
        %s224 = ssub.s32 %s14, 1
        %s225 = smul.u32 4, %s24
        %p226 = scmp.lt.s32.totalorder %s225, 11
        %s227 = scalar_select %p226, %s225, 11
        %p228 = scmp.lt.s32.totalorder %s23, 0
        %s229 = scalar_select %p228, %s23, 0
        %s230 = sadd.s32 %s229, %s227
        %s231 = smul.addr %s230, 2
        %s232 = scalar_lea.vmem %s0, %s231
        %p233 = pneg %p54
        %p234 = pneg %p51
        %p235 = scmp.lt.s32.totalorder %s23, 0
        %s236 = scalar_select %p235, %s23, 0
        %s237 = smul.addr %s236, 2
        %s238 = scalar_lea.vmem %s1, %s237
        %p239 = pneg %p80
        %p240 = pneg %p77
        %p241 = pneg %p101
        %p242 = pneg %p98
        %p243 = pneg %p122
        %p244 = pneg %p119
        %p245 = pneg %p143
        %p246 = pneg %p140
        %p247 = pneg %p171
        %p248 = pneg %p168
        %s249 = sand.u32 %s158, 1
        %s250 = scalar_lea.sflag [#allocation3], %s249
        %s251 = sand.u32 %s158, 1
        %s252 = smul.addr %s251, 4
        %s253 = scalar_lea.vmem [#allocation2], %s252
        %s254 = smul.u32 4, %s24
        %p255 = scmp.lt.s32.totalorder %s254, 11
        %s256 = scalar_select %p255, %s254, 11
        %p257 = scmp.lt.s32.totalorder %s23, 0
        %s258 = scalar_select %p257, %s23, 0
        %s259 = sadd.s32 %s258, %s256
        %s260 = smul.addr %s259, 2
        %s261 = scalar_lea.vmem %s0, %s260
        %s262 = smul.u32 4, %s24
        %p263 = scmp.lt.s32.totalorder %s23, 0
        %s264 = scalar_select %p263, %s23, 0
        %s265 = smul.addr %s264, 2
        %s266 = scalar_lea.vmem %s1, %s265
        %s267 = smul.u32 4, %s24
        %v268 = vld [vmem:[%s2] sm:$0x1f]
        %v269 = vld [vmem:[%s3] sm:$0xff]
        %v270 = vld [vmem:[%s3 + $0x8] sm:$0xff]
        %v271 = vld [vmem:[%s3 + $0x10] sm:$0xff]
        %v272 = vld [vmem:[%s3 + $0x18] sm:$0xff]
        %v273 = vld [vmem:[%s266] sm:$0x3]
        %v274 = vld [vmem:[%s4] sm:$0x1]
        %v275 = vld [vmem:[%s261] sm:$0x3]
        %vm276 = vcmask 39936
        %v278 = vsel %vm276, %v275, 0
        %vm280 = vcmask 1044480
        %v282 = vsel %vm280, %v268, 0
        %284 = vmatprep.subr.mxu0 0.0
        %285 = vmatpush1.msra.mxu0 %v282
        %286 = vmatprep.subr.mxu0 0.0
        %287 = vmatpush1.msra.mxu0 0.0
        %288 = vmatprep.subr.mxu0 0.0
        %289 = vmatpush1.msra.mxu0 0.0
        %290 = vmatprep.subr.mxu0 0.0
        %291 = vmatpush1.msra.mxu0 0.0
        %292 = vmatprep.subr.mxu0 0.0
        %293 = vmatpush1.msra.mxu0 0.0
        %294 = vmatprep.subr.mxu0 0.0
        %295 = vmatpush1.msra.mxu0 0.0
        %296 = vmatprep.subr.mxu0 0.0
        %297 = vmatpush1.msra.mxu0 0.0
        %298 = vmatprep.subr.mxu0 0.0
        %299 = vmatpush1.msra.mxu0 0.0
        %300 = vmatprep.subr.mxu0 0.0
        %301 = vmatpush1.msra.mxu0 0.0
        %302 = vmatprep.subr.mxu0 0.0
        %303 = vmatpush1.msra.mxu0 0.0
        %304 = vmatprep.subr.mxu0 0.0
        %305 = vmatpush1.msra.mxu0 0.0
        %306 = vmatprep.subr.mxu0 0.0
        %307 = vmatpush1.msra.mxu0 0.0
        %308 = vmatprep.subr.mxu0 0.0
        %309 = vmatpush1.msra.mxu0 0.0
        %310 = vmatprep.subr.mxu0 0.0
        %311 = vmatpush1.msra.mxu0 0.0
        %312 = vmatprep.subr.mxu0 0.0
        %313 = vmatpush1.msra.mxu0 0.0
        %314 = vmatprep.subr.mxu0 0.0
        %315 = vmatpush1.msra.mxu0 0.0
        %316 = vmatprep.subr.mxu0 0.0
        %317 = vmatpush1.msra.mxu0 0.0
        %318 = vmatprep.subr.mxu0 0.0
        %319 = vmatpush1.msra.mxu0 0.0
        %320 = vmatprep.subr.mxu0 0.0
        %321 = vmatpush1.msra.mxu0 0.0
        %322 = vmatprep.subr.mxu0 0.0
        %323 = vmatpush1.msra.mxu0 0.0
        %324 = vmatprep.subr.mxu0 0.0
        %325 = vmatpush1.msra.mxu0 0.0
        %326 = vmatprep.subr.mxu0 0.0
        %327 = vmatpush1.msra.mxu0 0.0
        %328 = vmatprep.subr.mxu0 0.0
        %329 = vmatpush1.msra.mxu0 0.0
        %330 = vmatprep.subr.mxu0 0.0
        %331 = vmatpush1.msra.mxu0 0.0
        %332 = vmatprep.subr.mxu0 0.0
        %333 = vmatpush1.msra.mxu0 0.0
        %334 = vmatprep.subr.mxu0 0.0
        %335 = vmatpush1.msra.mxu0 0.0
        %336 = vmatprep.subr.mxu0 0.0
        %337 = vmatpush1.msra.mxu0 0.0
        %338 = vmatprep.subr.mxu0 0.0
        %339 = vmatpush1.msra.mxu0 0.0
        %340 = vmatprep.subr.mxu0 0.0
        %341 = vmatpush1.msra.mxu0 0.0
        %342 = vmatprep.subr.mxu0 0.0
        %343 = vmatpush1.msra.mxu0 0.0
        %344 = vmatprep.subr.mxu0 0.0
        %345 = vmatpush1.msra.mxu0 0.0
        %346 = vmatprep.subr.mxu0 0.0
        %347 = vmatpush1.msra.mxu0 0.0
        %348 = vmatprep.mubr.f32.mxu0 0.0
        %349 = vmatmul.mubr.f32.gmra.mrb[0].mxu0 %v278
        %v350 = vpop.f32.mrb[0].mxu0
        %v351 = vadd.f32 %v273, %v350
        %v352 = vpop.f32.mrb[0].mxu0
        %353 = vdwg.mxu0
        %v354 = vmax.f32 %v351, 0.0
        %v356 = vlaneseq
        %v357 = vshrl.u32 %v356, 7
        %v358 = vsub.s32 0, %v357
        %v359 = vrot.slane %v274, %v358
        %vm361 = vcmask 261120
        %v363 = vsel %vm361, %v354, 0
        %365 = vmatprep.subr.mxu0 0.0
        %366 = vmatpush1.msra.mxu0 %v269
        %367 = vmatprep.subr.mxu0 0.0
        %368 = vmatpush1.msra.mxu0 %v270
        %369 = vmatprep.subr.mxu0 0.0
        %370 = vmatpush1.msra.mxu0 %v271
        %371 = vmatprep.subr.mxu0 0.0
        %372 = vmatpush1.msra.mxu0 %v272
        %373 = vmatprep.subr.mxu0 0.0
        %374 = vmatpush1.msra.mxu0 0.0
        %375 = vmatprep.subr.mxu0 0.0
        %376 = vmatpush1.msra.mxu0 0.0
        %377 = vmatprep.subr.mxu0 0.0
        %378 = vmatpush1.msra.mxu0 0.0
        %379 = vmatprep.subr.mxu0 0.0
        %380 = vmatpush1.msra.mxu0 0.0
        %381 = vmatprep.subr.mxu0 0.0
        %382 = vmatpush1.msra.mxu0 0.0
        %383 = vmatprep.subr.mxu0 0.0
        %384 = vmatpush1.msra.mxu0 0.0
        %385 = vmatprep.subr.mxu0 0.0
        %386 = vmatpush1.msra.mxu0 0.0
        %387 = vmatprep.subr.mxu0 0.0
        %388 = vmatpush1.msra.mxu0 0.0
        %389 = vmatprep.subr.mxu0 0.0
        %390 = vmatpush1.msra.mxu0 0.0
        %391 = vmatprep.subr.mxu0 0.0
        %392 = vmatpush1.msra.mxu0 0.0
        %393 = vmatprep.subr.mxu0 0.0
        %394 = vmatpush1.msra.mxu0 0.0
        %395 = vmatprep.subr.mxu0 0.0
        %396 = vmatpush1.msra.mxu0 0.0
        %397 = vmatprep.subr.mxu0 0.0
        %398 = vmatpush1.msra.mxu0 0.0
        %399 = vmatprep.subr.mxu0 0.0
        %400 = vmatpush1.msra.mxu0 0.0
        %401 = vmatprep.subr.mxu0 0.0
        %402 = vmatpush1.msra.mxu0 0.0
        %403 = vmatprep.subr.mxu0 0.0
        %404 = vmatpush1.msra.mxu0 0.0
        %405 = vmatprep.subr.mxu0 0.0
        %406 = vmatpush1.msra.mxu0 0.0
        %407 = vmatprep.subr.mxu0 0.0
        %408 = vmatpush1.msra.mxu0 0.0
        %409 = vmatprep.subr.mxu0 0.0
        %410 = vmatpush1.msra.mxu0 0.0
        %411 = vmatprep.subr.mxu0 0.0
        %412 = vmatpush1.msra.mxu0 0.0
        %413 = vmatprep.subr.mxu0 0.0
        %414 = vmatpush1.msra.mxu0 0.0
        %415 = vmatprep.subr.mxu0 0.0
        %416 = vmatpush1.msra.mxu0 0.0
        %417 = vmatprep.subr.mxu0 0.0
        %418 = vmatpush1.msra.mxu0 0.0
        %419 = vmatprep.subr.mxu0 0.0
        %420 = vmatpush1.msra.mxu0 0.0
        %421 = vmatprep.subr.mxu0 0.0
        %422 = vmatpush1.msra.mxu0 0.0
        %423 = vmatprep.subr.mxu0 0.0
        %424 = vmatpush1.msra.mxu0 0.0
        %425 = vmatprep.subr.mxu0 0.0
        %426 = vmatpush1.msra.mxu0 0.0
        %427 = vmatprep.subr.mxu0 0.0
        %428 = vmatpush1.msra.mxu0 0.0
        %429 = vmatprep.mubr.f32.mxu0 0.0
        %430 = vmatmul.mubr.f32.gmra.mrb[0].mxu0 %v363
        %v431 = vpop.f32.mrb[0].mxu0
        %v432 = vadd.f32 %v359, %v431
        %v433 = vpop.f32.mrb[0].mxu0
        %434 = vdwg.mxu0
        %v435 = vpack.c.bf16 %v432, %v432
        %436 = vst [vmem:[%s253] sm:$0x1] %v435
        %s437 = scalar_lea.vmem %s261, 2
        %v438 = vld [vmem:[%s437] sm:$0x3]
        %v440 = vsel %vm276, %v438, 0
        %442 = vmatprep.subr.mxu0 0.0
        %443 = vmatpush1.msra.mxu0 %v282
        %444 = vmatprep.subr.mxu0 0.0
        %445 = vmatpush1.msra.mxu0 0.0
        %446 = vmatprep.subr.mxu0 0.0
        %447 = vmatpush1.msra.mxu0 0.0
        %448 = vmatprep.subr.mxu0 0.0
        %449 = vmatpush1.msra.mxu0 0.0
        %450 = vmatprep.subr.mxu0 0.0
        %451 = vmatpush1.msra.mxu0 0.0
        %452 = vmatprep.subr.mxu0 0.0
        %453 = vmatpush1.msra.mxu0 0.0
        %454 = vmatprep.subr.mxu0 0.0
        %455 = vmatpush1.msra.mxu0 0.0
        %456 = vmatprep.subr.mxu0 0.0
        %457 = vmatpush1.msra.mxu0 0.0
        %458 = vmatprep.subr.mxu0 0.0
        %459 = vmatpush1.msra.mxu0 0.0
        %460 = vmatprep.subr.mxu0 0.0
        %461 = vmatpush1.msra.mxu0 0.0
        %462 = vmatprep.subr.mxu0 0.0
        %463 = vmatpush1.msra.mxu0 0.0
        %464 = vmatprep.subr.mxu0 0.0
        %465 = vmatpush1.msra.mxu0 0.0
        %466 = vmatprep.subr.mxu0 0.0
        %467 = vmatpush1.msra.mxu0 0.0
        %468 = vmatprep.subr.mxu0 0.0
        %469 = vmatpush1.msra.mxu0 0.0
        %470 = vmatprep.subr.mxu0 0.0
        %471 = vmatpush1.msra.mxu0 0.0
        %472 = vmatprep.subr.mxu0 0.0
        %473 = vmatpush1.msra.mxu0 0.0
        %474 = vmatprep.subr.mxu0 0.0
        %475 = vmatpush1.msra.mxu0 0.0
        %476 = vmatprep.subr.mxu0 0.0
        %477 = vmatpush1.msra.mxu0 0.0
        %478 = vmatprep.subr.mxu0 0.0
        %479 = vmatpush1.msra.mxu0 0.0
        %480 = vmatprep.subr.mxu0 0.0
        %481 = vmatpush1.msra.mxu0 0.0
        %482 = vmatprep.subr.mxu0 0.0
        %483 = vmatpush1.msra.mxu0 0.0
        %484 = vmatprep.subr.mxu0 0.0
        %485 = vmatpush1.msra.mxu0 0.0
        %486 = vmatprep.subr.mxu0 0.0
        %487 = vmatpush1.msra.mxu0 0.0
        %488 = vmatprep.subr.mxu0 0.0
        %489 = vmatpush1.msra.mxu0 0.0
        %490 = vmatprep.subr.mxu0 0.0
        %491 = vmatpush1.msra.mxu0 0.0
        %492 = vmatprep.subr.mxu0 0.0
        %493 = vmatpush1.msra.mxu0 0.0
        %494 = vmatprep.subr.mxu0 0.0
        %495 = vmatpush1.msra.mxu0 0.0
        %496 = vmatprep.subr.mxu0 0.0
        %497 = vmatpush1.msra.mxu0 0.0
        %498 = vmatprep.subr.mxu0 0.0
        %499 = vmatpush1.msra.mxu0 0.0
        %500 = vmatprep.subr.mxu0 0.0
        %501 = vmatpush1.msra.mxu0 0.0
        %502 = vmatprep.subr.mxu0 0.0
        %503 = vmatpush1.msra.mxu0 0.0
        %504 = vmatprep.subr.mxu0 0.0
        %505 = vmatpush1.msra.mxu0 0.0
        %506 = vmatprep.mubr.f32.mxu0 0.0
        %507 = vmatmul.mubr.f32.gmra.mrb[0].mxu0 %v440
        %v508 = vpop.f32.mrb[0].mxu0
        %v509 = vadd.f32 %v273, %v508
        %v510 = vpop.f32.mrb[0].mxu0
        %511 = vdwg.mxu0
        %v512 = vmax.f32 %v509, 0.0
        %v514 = vsel %vm361, %v512, 0
        %516 = vmatprep.subr.mxu0 0.0
        %517 = vmatpush1.msra.mxu0 %v269
        %518 = vmatprep.subr.mxu0 0.0
        %519 = vmatpush1.msra.mxu0 %v270
        %520 = vmatprep.subr.mxu0 0.0
        %521 = vmatpush1.msra.mxu0 %v271
        %522 = vmatprep.subr.mxu0 0.0
        %523 = vmatpush1.msra.mxu0 %v272
        %524 = vmatprep.subr.mxu0 0.0
        %525 = vmatpush1.msra.mxu0 0.0
        %526 = vmatprep.subr.mxu0 0.0
        %527 = vmatpush1.msra.mxu0 0.0
        %528 = vmatprep.subr.mxu0 0.0
        %529 = vmatpush1.msra.mxu0 0.0
        %530 = vmatprep.subr.mxu0 0.0
        %531 = vmatpush1.msra.mxu0 0.0
        %532 = vmatprep.subr.mxu0 0.0
        %533 = vmatpush1.msra.mxu0 0.0
        %534 = vmatprep.subr.mxu0 0.0
        %535 = vmatpush1.msra.mxu0 0.0
        %536 = vmatprep.subr.mxu0 0.0
        %537 = vmatpush1.msra.mxu0 0.0
        %538 = vmatprep.subr.mxu0 0.0
        %539 = vmatpush1.msra.mxu0 0.0
        %540 = vmatprep.subr.mxu0 0.0
        %541 = vmatpush1.msra.mxu0 0.0
        %542 = vmatprep.subr.mxu0 0.0
        %543 = vmatpush1.msra.mxu0 0.0
        %544 = vmatprep.subr.mxu0 0.0
        %545 = vmatpush1.msra.mxu0 0.0
        %546 = vmatprep.subr.mxu0 0.0
        %547 = vmatpush1.msra.mxu0 0.0
        %548 = vmatprep.subr.mxu0 0.0
        %549 = vmatpush1.msra.mxu0 0.0
        %550 = vmatprep.subr.mxu0 0.0
        %551 = vmatpush1.msra.mxu0 0.0
        %552 = vmatprep.subr.mxu0 0.0
        %553 = vmatpush1.msra.mxu0 0.0
        %554 = vmatprep.subr.mxu0 0.0
        %555 = vmatpush1.msra.mxu0 0.0
        %556 = vmatprep.subr.mxu0 0.0
        %557 = vmatpush1.msra.mxu0 0.0
        %558 = vmatprep.subr.mxu0 0.0
        %559 = vmatpush1.msra.mxu0 0.0
        %560 = vmatprep.subr.mxu0 0.0
        %561 = vmatpush1.msra.mxu0 0.0
        %562 = vmatprep.subr.mxu0 0.0
        %563 = vmatpush1.msra.mxu0 0.0
        %564 = vmatprep.subr.mxu0 0.0
        %565 = vmatpush1.msra.mxu0 0.0
        %566 = vmatprep.subr.mxu0 0.0
        %567 = vmatpush1.msra.mxu0 0.0
        %568 = vmatprep.subr.mxu0 0.0
        %569 = vmatpush1.msra.mxu0 0.0
        %570 = vmatprep.subr.mxu0 0.0
        %571 = vmatpush1.msra.mxu0 0.0
        %572 = vmatprep.subr.mxu0 0.0
        %573 = vmatpush1.msra.mxu0 0.0
        %574 = vmatprep.subr.mxu0 0.0
        %575 = vmatpush1.msra.mxu0 0.0
        %576 = vmatprep.subr.mxu0 0.0
        %577 = vmatpush1.msra.mxu0 0.0
        %578 = vmatprep.subr.mxu0 0.0
        %579 = vmatpush1.msra.mxu0 0.0
        %580 = vmatprep.mubr.f32.mxu0 0.0
        %581 = vmatmul.mubr.f32.gmra.mrb[0].mxu0 %v514
        %v582 = vpop.f32.mrb[0].mxu0
        %v583 = vadd.f32 %v359, %v582
        %v584 = vpop.f32.mrb[0].mxu0
        %585 = vdwg.mxu0
        %v586 = vpack.c.bf16 %v583, %v583
        %s587 = scalar_lea.vmem %s253, 1 [#allocation2]
        %588 = vst [vmem:[%s587] sm:$0x1] %v586
        %s589 = scalar_lea.vmem %s261, 4
        %v590 = vld [vmem:[%s589] sm:$0x3]
        %v592 = vsel %vm276, %v590, 0
        %594 = vmatprep.subr.mxu0 0.0
        %595 = vmatpush1.msra.mxu0 %v282
        %596 = vmatprep.subr.mxu0 0.0
        %597 = vmatpush1.msra.mxu0 0.0
        %598 = vmatprep.subr.mxu0 0.0
        %599 = vmatpush1.msra.mxu0 0.0
        %600 = vmatprep.subr.mxu0 0.0
        %601 = vmatpush1.msra.mxu0 0.0
        %602 = vmatprep.subr.mxu0 0.0
        %603 = vmatpush1.msra.mxu0 0.0
        %604 = vmatprep.subr.mxu0 0.0
        %605 = vmatpush1.msra.mxu0 0.0
        %606 = vmatprep.subr.mxu0 0.0
        %607 = vmatpush1.msra.mxu0 0.0
        %608 = vmatprep.subr.mxu0 0.0
        %609 = vmatpush1.msra.mxu0 0.0
        %610 = vmatprep.subr.mxu0 0.0
        %611 = vmatpush1.msra.mxu0 0.0
        %612 = vmatprep.subr.mxu0 0.0
        %613 = vmatpush1.msra.mxu0 0.0
        %614 = vmatprep.subr.mxu0 0.0
        %615 = vmatpush1.msra.mxu0 0.0
        %616 = vmatprep.subr.mxu0 0.0
        %617 = vmatpush1.msra.mxu0 0.0
        %618 = vmatprep.subr.mxu0 0.0
        %619 = vmatpush1.msra.mxu0 0.0
        %620 = vmatprep.subr.mxu0 0.0
        %621 = vmatpush1.msra.mxu0 0.0
        %622 = vmatprep.subr.mxu0 0.0
        %623 = vmatpush1.msra.mxu0 0.0
        %624 = vmatprep.subr.mxu0 0.0
        %625 = vmatpush1.msra.mxu0 0.0
        %626 = vmatprep.subr.mxu0 0.0
        %627 = vmatpush1.msra.mxu0 0.0
        %628 = vmatprep.subr.mxu0 0.0
        %629 = vmatpush1.msra.mxu0 0.0
        %630 = vmatprep.subr.mxu0 0.0
        %631 = vmatpush1.msra.mxu0 0.0
        %632 = vmatprep.subr.mxu0 0.0
        %633 = vmatpush1.msra.mxu0 0.0
        %634 = vmatprep.subr.mxu0 0.0
        %635 = vmatpush1.msra.mxu0 0.0
        %636 = vmatprep.subr.mxu0 0.0
        %637 = vmatpush1.msra.mxu0 0.0
        %638 = vmatprep.subr.mxu0 0.0
        %639 = vmatpush1.msra.mxu0 0.0
        %640 = vmatprep.subr.mxu0 0.0
        %641 = vmatpush1.msra.mxu0 0.0
        %642 = vmatprep.subr.mxu0 0.0
        %643 = vmatpush1.msra.mxu0 0.0
        %644 = vmatprep.subr.mxu0 0.0
        %645 = vmatpush1.msra.mxu0 0.0
        %646 = vmatprep.subr.mxu0 0.0
        %647 = vmatpush1.msra.mxu0 0.0
        %648 = vmatprep.subr.mxu0 0.0
        %649 = vmatpush1.msra.mxu0 0.0
        %650 = vmatprep.subr.mxu0 0.0
        %651 = vmatpush1.msra.mxu0 0.0
        %652 = vmatprep.subr.mxu0 0.0
        %653 = vmatpush1.msra.mxu0 0.0
        %654 = vmatprep.subr.mxu0 0.0
        %655 = vmatpush1.msra.mxu0 0.0
        %656 = vmatprep.subr.mxu0 0.0
        %657 = vmatpush1.msra.mxu0 0.0
        %658 = vmatprep.mubr.f32.mxu0 0.0
        %659 = vmatmul.mubr.f32.gmra.mrb[0].mxu0 %v592
        %v660 = vpop.f32.mrb[0].mxu0
        %v661 = vadd.f32 %v273, %v660
        %v662 = vpop.f32.mrb[0].mxu0
        %663 = vdwg.mxu0
        %v664 = vmax.f32 %v661, 0.0
        %v666 = vsel %vm361, %v664, 0
        %668 = vmatprep.subr.mxu0 0.0
        %669 = vmatpush1.msra.mxu0 %v269
        %670 = vmatprep.subr.mxu0 0.0
        %671 = vmatpush1.msra.mxu0 %v270
        %672 = vmatprep.subr.mxu0 0.0
        %673 = vmatpush1.msra.mxu0 %v271
        %674 = vmatprep.subr.mxu0 0.0
        %675 = vmatpush1.msra.mxu0 %v272
        %676 = vmatprep.subr.mxu0 0.0
        %677 = vmatpush1.msra.mxu0 0.0
        %678 = vmatprep.subr.mxu0 0.0
        %679 = vmatpush1.msra.mxu0 0.0
        %680 = vmatprep.subr.mxu0 0.0
        %681 = vmatpush1.msra.mxu0 0.0
        %682 = vmatprep.subr.mxu0 0.0
        %683 = vmatpush1.msra.mxu0 0.0
        %684 = vmatprep.subr.mxu0 0.0
        %685 = vmatpush1.msra.mxu0 0.0
        %686 = vmatprep.subr.mxu0 0.0
        %687 = vmatpush1.msra.mxu0 0.0
        %688 = vmatprep.subr.mxu0 0.0
        %689 = vmatpush1.msra.mxu0 0.0
        %690 = vmatprep.subr.mxu0 0.0
        %691 = vmatpush1.msra.mxu0 0.0
        %692 = vmatprep.subr.mxu0 0.0
        %693 = vmatpush1.msra.mxu0 0.0
        %694 = vmatprep.subr.mxu0 0.0
        %695 = vmatpush1.msra.mxu0 0.0
        %696 = vmatprep.subr.mxu0 0.0
        %697 = vmatpush1.msra.mxu0 0.0
        %698 = vmatprep.subr.mxu0 0.0
        %699 = vmatpush1.msra.mxu0 0.0
        %700 = vmatprep.subr.mxu0 0.0
        %701 = vmatpush1.msra.mxu0 0.0
        %702 = vmatprep.subr.mxu0 0.0
        %703 = vmatpush1.msra.mxu0 0.0
        %704 = vmatprep.subr.mxu0 0.0
        %705 = vmatpush1.msra.mxu0 0.0
        %706 = vmatprep.subr.mxu0 0.0
        %707 = vmatpush1.msra.mxu0 0.0
        %708 = vmatprep.subr.mxu0 0.0
        %709 = vmatpush1.msra.mxu0 0.0
        %710 = vmatprep.subr.mxu0 0.0
        %711 = vmatpush1.msra.mxu0 0.0
        %712 = vmatprep.subr.mxu0 0.0
        %713 = vmatpush1.msra.mxu0 0.0
        %714 = vmatprep.subr.mxu0 0.0
        %715 = vmatpush1.msra.mxu0 0.0
        %716 = vmatprep.subr.mxu0 0.0
        %717 = vmatpush1.msra.mxu0 0.0
        %718 = vmatprep.subr.mxu0 0.0
        %719 = vmatpush1.msra.mxu0 0.0
        %720 = vmatprep.subr.mxu0 0.0
        %721 = vmatpush1.msra.mxu0 0.0
        %722 = vmatprep.subr.mxu0 0.0
        %723 = vmatpush1.msra.mxu0 0.0
        %724 = vmatprep.subr.mxu0 0.0
        %725 = vmatpush1.msra.mxu0 0.0
        %726 = vmatprep.subr.mxu0 0.0
        %727 = vmatpush1.msra.mxu0 0.0
        %728 = vmatprep.subr.mxu0 0.0
        %729 = vmatpush1.msra.mxu0 0.0
        %730 = vmatprep.subr.mxu0 0.0
        %731 = vmatpush1.msra.mxu0 0.0
        %732 = vmatprep.mubr.f32.mxu0 0.0
        %733 = vmatmul.mubr.f32.gmra.mrb[0].mxu0 %v666
        %v734 = vpop.f32.mrb[0].mxu0
        %v735 = vadd.f32 %v359, %v734
        %v736 = vpop.f32.mrb[0].mxu0
        %737 = vdwg.mxu0
        %v738 = vpack.c.bf16 %v735, %v735
        %s739 = scalar_lea.vmem %s253, 2 [#allocation2]
        %740 = vst [vmem:[%s739] sm:$0x1] %v738
        %s741 = scalar_lea.vmem %s261, 6
        %v742 = vld [vmem:[%s741] sm:$0x3]
        %v744 = vsel %vm276, %v742, 0
        %746 = vmatprep.subr.mxu0 0.0
        %747 = vmatpush1.msra.mxu0 %v282
        %748 = vmatprep.subr.mxu0 0.0
        %749 = vmatpush1.msra.mxu0 0.0
        %750 = vmatprep.subr.mxu0 0.0
        %751 = vmatpush1.msra.mxu0 0.0
        %752 = vmatprep.subr.mxu0 0.0
        %753 = vmatpush1.msra.mxu0 0.0
        %754 = vmatprep.subr.mxu0 0.0
        %755 = vmatpush1.msra.mxu0 0.0
        %756 = vmatprep.subr.mxu0 0.0
        %757 = vmatpush1.msra.mxu0 0.0
        %758 = vmatprep.subr.mxu0 0.0
        %759 = vmatpush1.msra.mxu0 0.0
        %760 = vmatprep.subr.mxu0 0.0
        %761 = vmatpush1.msra.mxu0 0.0
        %762 = vmatprep.subr.mxu0 0.0
        %763 = vmatpush1.msra.mxu0 0.0
        %764 = vmatprep.subr.mxu0 0.0
        %765 = vmatpush1.msra.mxu0 0.0
        %766 = vmatprep.subr.mxu0 0.0
        %767 = vmatpush1.msra.mxu0 0.0
        %768 = vmatprep.subr.mxu0 0.0
        %769 = vmatpush1.msra.mxu0 0.0
        %770 = vmatprep.subr.mxu0 0.0
        %771 = vmatpush1.msra.mxu0 0.0
        %772 = vmatprep.subr.mxu0 0.0
        %773 = vmatpush1.msra.mxu0 0.0
        %774 = vmatprep.subr.mxu0 0.0
        %775 = vmatpush1.msra.mxu0 0.0
        %776 = vmatprep.subr.mxu0 0.0
        %777 = vmatpush1.msra.mxu0 0.0
        %778 = vmatprep.subr.mxu0 0.0
        %779 = vmatpush1.msra.mxu0 0.0
        %780 = vmatprep.subr.mxu0 0.0
        %781 = vmatpush1.msra.mxu0 0.0
        %782 = vmatprep.subr.mxu0 0.0
        %783 = vmatpush1.msra.mxu0 0.0
        %784 = vmatprep.subr.mxu0 0.0
        %785 = vmatpush1.msra.mxu0 0.0
        %786 = vmatprep.subr.mxu0 0.0
        %787 = vmatpush1.msra.mxu0 0.0
        %788 = vmatprep.subr.mxu0 0.0
        %789 = vmatpush1.msra.mxu0 0.0
        %790 = vmatprep.subr.mxu0 0.0
        %791 = vmatpush1.msra.mxu0 0.0
        %792 = vmatprep.subr.mxu0 0.0
        %793 = vmatpush1.msra.mxu0 0.0
        %794 = vmatprep.subr.mxu0 0.0
        %795 = vmatpush1.msra.mxu0 0.0
        %796 = vmatprep.subr.mxu0 0.0
        %797 = vmatpush1.msra.mxu0 0.0
        %798 = vmatprep.subr.mxu0 0.0
        %799 = vmatpush1.msra.mxu0 0.0
        %800 = vmatprep.subr.mxu0 0.0
        %801 = vmatpush1.msra.mxu0 0.0
        %802 = vmatprep.subr.mxu0 0.0
        %803 = vmatpush1.msra.mxu0 0.0
        %804 = vmatprep.subr.mxu0 0.0
        %805 = vmatpush1.msra.mxu0 0.0
        %806 = vmatprep.subr.mxu0 0.0
        %807 = vmatpush1.msra.mxu0 0.0
        %808 = vmatprep.subr.mxu0 0.0
        %809 = vmatpush1.msra.mxu0 0.0
        %810 = vmatprep.mubr.f32.mxu0 0.0
        %811 = vmatmul.mubr.f32.gmra.mrb[0].mxu0 %v744
        %v812 = vpop.f32.mrb[0].mxu0
        %v813 = vadd.f32 %v273, %v812
        %v814 = vpop.f32.mrb[0].mxu0
        %815 = vdwg.mxu0
        %v816 = vmax.f32 %v813, 0.0
        %v818 = vsel %vm361, %v816, 0
        %820 = vmatprep.subr.mxu0 0.0
        %821 = vmatpush1.msra.mxu0 %v269
        %822 = vmatprep.subr.mxu0 0.0
        %823 = vmatpush1.msra.mxu0 %v270
        %824 = vmatprep.subr.mxu0 0.0
        %825 = vmatpush1.msra.mxu0 %v271
        %826 = vmatprep.subr.mxu0 0.0
        %827 = vmatpush1.msra.mxu0 %v272
        %828 = vmatprep.subr.mxu0 0.0
        %829 = vmatpush1.msra.mxu0 0.0
        %830 = vmatprep.subr.mxu0 0.0
        %831 = vmatpush1.msra.mxu0 0.0
        %832 = vmatprep.subr.mxu0 0.0
        %833 = vmatpush1.msra.mxu0 0.0
        %834 = vmatprep.subr.mxu0 0.0
        %835 = vmatpush1.msra.mxu0 0.0
        %836 = vmatprep.subr.mxu0 0.0
        %837 = vmatpush1.msra.mxu0 0.0
        %838 = vmatprep.subr.mxu0 0.0
        %839 = vmatpush1.msra.mxu0 0.0
        %840 = vmatprep.subr.mxu0 0.0
        %841 = vmatpush1.msra.mxu0 0.0
        %842 = vmatprep.subr.mxu0 0.0
        %843 = vmatpush1.msra.mxu0 0.0
        %844 = vmatprep.subr.mxu0 0.0
        %845 = vmatpush1.msra.mxu0 0.0
        %846 = vmatprep.subr.mxu0 0.0
        %847 = vmatpush1.msra.mxu0 0.0
        %848 = vmatprep.subr.mxu0 0.0
        %849 = vmatpush1.msra.mxu0 0.0
        %850 = vmatprep.subr.mxu0 0.0
        %851 = vmatpush1.msra.mxu0 0.0
        %852 = vmatprep.subr.mxu0 0.0
        %853 = vmatpush1.msra.mxu0 0.0
        %854 = vmatprep.subr.mxu0 0.0
        %855 = vmatpush1.msra.mxu0 0.0
        %856 = vmatprep.subr.mxu0 0.0
        %857 = vmatpush1.msra.mxu0 0.0
        %858 = vmatprep.subr.mxu0 0.0
        %859 = vmatpush1.msra.mxu0 0.0
        %860 = vmatprep.subr.mxu0 0.0
        %861 = vmatpush1.msra.mxu0 0.0
        %862 = vmatprep.subr.mxu0 0.0
        %863 = vmatpush1.msra.mxu0 0.0
        %864 = vmatprep.subr.mxu0 0.0
        %865 = vmatpush1.msra.mxu0 0.0
        %866 = vmatprep.subr.mxu0 0.0
        %867 = vmatpush1.msra.mxu0 0.0
        %868 = vmatprep.subr.mxu0 0.0
        %869 = vmatpush1.msra.mxu0 0.0
        %870 = vmatprep.subr.mxu0 0.0
        %871 = vmatpush1.msra.mxu0 0.0
        %872 = vmatprep.subr.mxu0 0.0
        %873 = vmatpush1.msra.mxu0 0.0
        %874 = vmatprep.subr.mxu0 0.0
        %875 = vmatpush1.msra.mxu0 0.0
        %876 = vmatprep.subr.mxu0 0.0
        %877 = vmatpush1.msra.mxu0 0.0
        %878 = vmatprep.subr.mxu0 0.0
        %879 = vmatpush1.msra.mxu0 0.0
        %880 = vmatprep.subr.mxu0 0.0
        %881 = vmatpush1.msra.mxu0 0.0
        %882 = vmatprep.subr.mxu0 0.0
        %883 = vmatpush1.msra.mxu0 0.0
        %884 = vmatprep.mubr.f32.mxu0 0.0
        %885 = vmatmul.mubr.f32.gmra.mrb[0].mxu0 %v818
        %v886 = vpop.f32.mrb[0].mxu0
        %v887 = vadd.f32 %v359, %v886
        %v888 = vpop.f32.mrb[0].mxu0
        %889 = vdwg.mxu0
        %v890 = vpack.c.bf16 %v887, %v887
        %s891 = scalar_lea.vmem %s253, 3 [#allocation2]
        %892 = vst [vmem:[%s891] sm:$0x1] %v890
        %s893 = sand.u32 %s158, 1
        %s894 = scalar_lea.sflag [#allocation3], %s893
        %s895 = sand.u32 %s158, 1
        %s896 = smul.addr %s895, 4
        %s897 = scalar_lea.vmem [#allocation2], %s896
        // Predicated region
        $region41: #{tpu_custom_call.1} parent=39 // pred_check
          %p898 = pneg %p168
        $region42: #{tpu_custom_call.1} parent=39 // pred_check_branch
          %900 = sbr.rel (%p898) target = $region44
        $region43: #{tpu_custom_call.1} parent=39 // pred_region
          %s901 = smul.u32 4, %s24
          %s903 = ssub.s32 64, 64
          %904 = vsyncadd %s894, %s903
          %s905 = sadd.s32 %s23, %s901
          %s906 = smul.addr %s905, 16
          %s907 = scalar_lea.hbm %s5, %s906
          %s908 = sshll.u32 %s897, 4
          %s909 = int_to_ptr.vmem [resolvable:$true] %s908
          %914 = dma.vmem_to_hbm [thread:$0]  %s909, 64, %s907, %s894, 16, 16, 1
        $region44: #{tpu_custom_call.1} parent=39 // pred_fallthru
          _
      $region40: #{tpu_custom_call.1} parent=5 // pred_fallthru
        _
      %p915 = scmp.le.s32.totalorder 2, %s14
      // Predicated region
      $region45: #{tpu_custom_call.1} parent=5 // pred_check
        %p916 = pneg %p915
      $region46: #{tpu_custom_call.1} parent=5 // pred_check_branch
        %918 = sbr.rel (%p916) target = $region48
      $region47: #{tpu_custom_call.1} parent=5 // pred_region
        %s919 = ssub.s32 %s14, 2
        // Predicated region
        $region49: #{tpu_custom_call.1} parent=47 // pred_check
          %p920 = pneg %p174
        $region50: #{tpu_custom_call.1} parent=47 // pred_check_branch
          %922 = sbr.rel (%p920) target = $region52
        $region51: #{tpu_custom_call.1} parent=47 // pred_region
          %s923 = sand.u32 %s159, 1
          %s924 = scalar_lea.sflag [#allocation3], %s923
          %s925 = sand.u32 %s159, 1
          %s926 = smul.addr %s925, 4
          %s927 = scalar_lea.vmem [#allocation2], %s926
          %928 = dma.done %s924, 64
        $region52: #{tpu_custom_call.1} parent=47 // pred_fallthru
          _
      $region48: #{tpu_custom_call.1} parent=5 // pred_fallthru
        _
    $region6: #{tpu_custom_call.1} parent=1 // loop_footer
      %s18 = sadd.s32 1, %s14
    $region7: #{tpu_custom_call.1} parent=1 // loop_footer_branch
      %13 = sbr.rel target = $region3
    $region8: #{tpu_custom_call.1} parent=1 // loop_exit
      _
    %929 = vsyncpa [#allocation3], 1
    %s930 = scalar_lea.sflag [#allocation3], 1
    %931 = vsyncpa %s930, 1

</llo_original>
